<compile_context>
chip_gen: v5e
topology: v5e:2x2
jax: 0.10.0
libtpu: 0.0.40
codegen_flags: <defaults>
</compile_context>

<pallas_src>
import jax
import jax.numpy as jnp
from jax.experimental import pallas as pl
from jax.experimental.pallas import tpu as pltpu

_LANE = 128
_SMALL_PROBLEM_ELEMS = 100_000   # below this, the fused XLA einsum wins


def _round_up(v, m):
    return ((v + m - 1) // m) * m


def _cdiv(a, b):
    return (a + b - 1) // b


def _vmem_budget_bytes():
    """Conservative per-kernel VMEM budget (bytes) used for tile sizing."""
    try:
        phys = int(pltpu.get_tpu_info().vmem_capacity_bytes)
    except Exception:
        phys = 64 << 20          # v7x has the smallest VMEM (64 MiB per TC)
    return max(phys // 2, 16 << 20)   # leave headroom for compiler scratch


# ----------------------------------------------------------------------------
# Kernel body (shared by both paths): Y(C_out, t) = W(C_out, C_in) @ X(C_in, t) + b
# ----------------------------------------------------------------------------
def _conv1x1_kernel(x_ref, w_ref, b_ref, o_ref):
    # x_ref: (C_in, t), w_ref: (C_out, C_in), b_ref: (C_out, 1), o_ref: (C_out, t)
    y = jnp.dot(w_ref[...], x_ref[...], preferred_element_type=jnp.float32)
    y = y + b_ref[...]                        # bias broadcast over the lane axis (f32)
    o_ref[...] = y.astype(o_ref.dtype)


# ----------------------------------------------------------------------------
# Main path: native channels-first layout, grid over (batch, L-tiles)
# ----------------------------------------------------------------------------
def _choose_tile_cols(L, N, c_in, c_out, itemsize):
    bytes_per_col = max((c_in + c_out) * itemsize, 1)
    # Target ~6 MiB of in+out tile traffic per grid step to amortize the
    # ~0.35 us/step pipeline overhead; cap by VMEM budget (double-buffered).
    target = 6 << 20
    tL = (target // bytes_per_col) // _LANE * _LANE
    budget = _vmem_budget_bytes()
    vmem_cap = (budget // (2 * bytes_per_col)) // _LANE * _LANE
    tL = max(_LANE, min(tL, vmem_cap, 32768, _round_up(L, _LANE)))
    # Keep at least a few grid steps so v7x megacore can feed both TensorCores.
    while N * _cdiv(L, tL) < 4 and tL > _LANE:
        new_tL = max(_LANE, (tL // 2) // _LANE * _LANE)
        if new_tL == tL:
            break
        tL = new_tL
    if tL >= L:
        tL = L   # full-extent block is legal even if L % 128 != 0
    return tL


def _conv1x1_native(x, w2d, b2d, tile_cols=None):
    N, C_in, L = x.shape
    C_out = w2d.shape[0]
    itemsize = jnp.dtype(x.dtype).itemsize

    tL = tile_cols if tile_cols is not None else _choose_tile_cols(
        L, N, C_in, C_out, itemsize)
    tL = min(tL, L)
    num_l = _cdiv(L, tL)

    # Explicit VMEM limit: 2 buffers x (in + out) tiles + resident W/b + slack.
    tile_bytes = (C_in + C_out) * tL * itemsize
    resident_bytes = (C_out * C_in + C_out) * jnp.dtype(w2d.dtype).itemsize
    vmem_limit = int(2 * tile_bytes * 1.5 + 2 * resident_bytes + (1 << 20))
    vmem_limit = min(max(vmem_limit, 4 << 20), 48 << 20)   # stay under v7x physical

    return pl.pallas_call(
        _conv1x1_kernel,
        out_shape=jax.ShapeDtypeStruct((N, C_out, L), x.dtype),
        grid=(N, num_l),
        in_specs=[
            pl.BlockSpec((None, C_in, tL), lambda n, l: (n, 0, l)),   # x, native layout
            pl.BlockSpec((C_out, C_in), lambda n, l: (0, 0)),         # weight, resident
            pl.BlockSpec((C_out, 1), lambda n, l: (0, 0)),            # bias, resident
        ],
        out_specs=pl.BlockSpec((None, C_out, tL), lambda n, l: (n, 0, l)),
        compiler_params=pltpu.CompilerParams(
            dimension_semantics=("parallel", "parallel"),   # megacore sharding on v7x
            vmem_limit_bytes=vmem_limit,
        ),
    )(x, w2d, b2d)


# ----------------------------------------------------------------------------
# Fallback path for L < 128: collapse (N, L) into one lane-dense axis.
# ----------------------------------------------------------------------------
def _conv1x1_collapsed(x, w2d, b2d):
    N, C_in, L = x.shape
    C_out = w2d.shape[0]
    itemsize = jnp.dtype(x.dtype).itemsize
    M_total = N * L

    bytes_per_col = max((C_in + C_out) * itemsize, 1)
    tM = max(_LANE, min((6 << 20) // bytes_per_col // _LANE * _LANE,
                        16384, _round_up(M_total, _LANE)))
    M_pad = _round_up(M_total, tM)
    num_m = M_pad // tM

    # Layout plumbing (only reached for tiny L): (N, C_in, L) -> (C_in, N*L).
    x2d = jnp.transpose(x, (1, 0, 2)).reshape(C_in, M_total)
    if M_pad != M_total:
        x2d = jnp.pad(x2d, ((0, 0), (0, M_pad - M_total)))

    tile_bytes = (C_in + C_out) * tM * itemsize
    vmem_limit = min(max(int(2 * tile_bytes * 1.5 + (1 << 20)), 4 << 20), 48 << 20)

    y2d = pl.pallas_call(
        _conv1x1_kernel,
        out_shape=jax.ShapeDtypeStruct((C_out, M_pad), x.dtype),
        grid=(num_m,),
        in_specs=[
            pl.BlockSpec((C_in, tM), lambda m: (0, m)),
            pl.BlockSpec((C_out, C_in), lambda m: (0, 0)),
            pl.BlockSpec((C_out, 1), lambda m: (0, 0)),
        ],
        out_specs=pl.BlockSpec((C_out, tM), lambda m: (0, m)),
        compiler_params=pltpu.CompilerParams(
            dimension_semantics=("parallel",),
            vmem_limit_bytes=vmem_limit,
        ),
    )(x2d, w2d, b2d)

    y2d = y2d[:, :M_total]
    return jnp.transpose(y2d.reshape(C_out, N, L), (1, 0, 2))


# ----------------------------------------------------------------------------
# Public wrapper (matches Local_Encoder_Embedding.forward)
# ----------------------------------------------------------------------------
def local_encoder_embedding(x, weight, bias, *, force_pallas=False, tile_cols=None):
    """Conv1d(kernel_size=1) forward: x (N, C_in, L) -> (N, C_out, L)."""
    assert weight.ndim == 3 and weight.shape[2] == 1, (
        f"Local_Encoder_Embedding uses kernel_size=1; got weight shape {weight.shape}")
    N, C_in, L = x.shape
    C_out = weight.shape[0]
    w2d = weight[:, :, 0]                    # (C_out, C_in)

    # Tiny problems: pallas_call fixed cost dominates; let XLA fuse the einsum.
    if not force_pallas and N * L * C_out < _SMALL_PROBLEM_ELEMS:
        return jnp.einsum("oc,ncl->nol", w2d, x) + bias[None, :, None]

    b2d = bias.reshape(C_out, 1)             # (C_out, 1)
    if L >= _LANE:
        return _conv1x1_native(x, w2d, b2d, tile_cols=tile_cols)
    return _conv1x1_collapsed(x, w2d, b2d)   # lane-dense fallback for short L


if __name__ == "__main__":
    def ref_fn(x, weight, bias):
        return jnp.einsum("oc,ncl->nol", weight[:, :, 0], x) + bias[None, :, None]

    key = jax.random.PRNGKey(0)

    # Module config: input_size=C_in, const -> C_out = C_in * const
    C_in, const = 4, 8
    C_out = C_in * const
    bound = 1.0 / (C_in ** 0.5)
    kw, kb, kx1, kx2 = jax.random.split(key, 4)
    weight = jax.random.uniform(kw, (C_out, C_in, 1), minval=-bound, maxval=bound,
                                dtype=jnp.float32)
    bias = jax.random.uniform(kb, (C_out,), minval=-bound, maxval=bound,
                              dtype=jnp.float32)

    # 1) Spec-sized input (N=2, C_in=4, L=16): exercises the collapsed-layout
    #    Pallas path (L < 128), forced past the tiny-problem einsum fallback.
    x_small = jax.random.normal(kx1, (2, C_in, 16), dtype=jnp.float32)
    out_small = jax.block_until_ready(
        local_encoder_embedding(x_small, weight, bias, force_pallas=True))
    assert out_small.shape == (2, C_out, 16), out_small.shape
    assert jnp.allclose(out_small, ref_fn(x_small, weight, bias), atol=1e-5, rtol=1e-5)

    # 2) Native channels-first path with several lane tiles per batch element.
    x_big = jax.random.normal(kx2, (2, C_in, 384), dtype=jnp.float32)
    out_big = jax.block_until_ready(
        local_encoder_embedding(x_big, weight, bias, force_pallas=True, tile_cols=128))
    assert out_big.shape == (2, C_out, 384), out_big.shape
    assert jnp.allclose(out_big, ref_fn(x_big, weight, bias), atol=1e-5, rtol=1e-5)

    # 3) Default dispatch on a tiny problem -> fused XLA einsum fallback.
    out_default = jax.block_until_ready(local_encoder_embedding(x_small, weight, bias))
    assert jnp.allclose(out_default, ref_fn(x_small, weight, bias), atol=1e-5, rtol=1e-5)

    print("KERNEL_OK")
</pallas_src>

<mosaic_0001>
module attributes {stable_mosaic.version = 11 : i64} {
  func.func @_conv1x1_kernel(%arg0: i32, %arg1: memref<4x128xf32, #tpu.memory_space<vmem>>, %arg2: memref<32x4xf32, #tpu.memory_space<vmem>>, %arg3: memref<32x1xf32, #tpu.memory_space<vmem>>, %arg4: memref<32x128xf32, #tpu.memory_space<vmem>>) attributes {dimension_semantics = [#tpu.dimension_semantics<parallel>], iteration_bounds = array<i64: 1>, scalar_prefetch = 0 : i64, scratch_operands = 0 : i64, tpu.core_type = #tpu.core_type<tc>, window_params = [{transform_indices = @transform_0, window_bounds = array<i64: 4, 128>}, {pipeline_mode = #tpu.pipeline_mode<synchronous>, transform_indices = @transform_1, window_bounds = array<i64: 32, 4>}, {pipeline_mode = #tpu.pipeline_mode<synchronous>, transform_indices = @transform_2, window_bounds = array<i64: 32, 1>}, {transform_indices = @transform_3, window_bounds = array<i64: 32, 128>}]} {
    %c0 = arith.constant 0 : index
    %c0_0 = arith.constant 0 : index
    %0 = vector.load %arg2[%c0, %c0_0] : memref<32x4xf32, #tpu.memory_space<vmem>>, vector<32x4xf32>
    %c0_1 = arith.constant 0 : index
    %c0_2 = arith.constant 0 : index
    %1 = vector.load %arg1[%c0_1, %c0_2] : memref<4x128xf32, #tpu.memory_space<vmem>>, vector<4x128xf32>
    %cst = arith.constant dense<0.000000e+00> : vector<32x128xf32>
    %2 = tpu.matmul %0, %1, %cst {dimension_numbers = #tpu.dot_dimension_numbers<[1], [0], [0], [1], [0, 0, 1, 1], [], []>} : vector<32x4xf32>, vector<4x128xf32>, vector<32x128xf32> -> vector<32x128xf32>
    %c0_3 = arith.constant 0 : index
    %c0_4 = arith.constant 0 : index
    %3 = vector.load %arg3[%c0_3, %c0_4] : memref<32x1xf32, #tpu.memory_space<vmem>>, vector<32x1xf32>
    %4 = vector.broadcast %3 : vector<32x1xf32> to vector<32x128xf32>
    %5 = arith.addf %2, %4 : vector<32x128xf32>
    %c0_5 = arith.constant 0 : index
    %c0_6 = arith.constant 0 : index
    %6 = vector.load %arg4[%c0_5, %c0_6] : memref<32x128xf32, #tpu.memory_space<vmem>>, vector<32x128xf32>
    tpu.vector_store %arg4[%c0_5, %c0_6], %5 {strides = array<i32>} : memref<32x128xf32, #tpu.memory_space<vmem>>, vector<32x128xf32>,
    return
  }
  func.func @transform_0(%arg0: i32) -> (i32, i32) {
    %c0_i32 = arith.constant 0 : i32
    %c0_i32_0 = arith.constant 0 : i32
    return %c0_i32, %arg0 : i32, i32
  }
  func.func @transform_1(%arg0: i32) -> (i32, i32) {
    %c0_i32 = arith.constant 0 : i32
    %c0_i32_0 = arith.constant 0 : i32
    %c0_i32_1 = arith.constant 0 : i32
    return %c0_i32, %c0_i32_0 : i32, i32
  }
  func.func @transform_2(%arg0: i32) -> (i32, i32) {
    %c0_i32 = arith.constant 0 : i32
    %c0_i32_0 = arith.constant 0 : i32
    %c0_i32_1 = arith.constant 0 : i32
    return %c0_i32, %c0_i32_0 : i32, i32
  }
  func.func @transform_3(%arg0: i32) -> (i32, i32) {
    %c0_i32 = arith.constant 0 : i32
    %c0_i32_0 = arith.constant 0 : i32
    return %c0_i32, %arg0 : i32, i32
  }
}

</mosaic_0001>

<llo_original>
// kernel: tpu_custom_call.1
$region0: #{tpu_custom_call.1}
  #allocation0 [shape = 'u32[]', space=smem, size = 0x4, offset = 0x4, fixed_abs, tag = 'smem constant byte address 0x4 - core index']
  #allocation1 [shape = 'u32[72,128]{1,0:T(1,128)}', space=vmem, size = 0x9000, scoped, tag = 'internal scratch']
  %s0 = inlined_call_operand.vmem [shape: f32[4,128], index: 0, kind: input, shape index: {}]
  %s1 = inlined_call_operand.vmem [shape: f32[32,4], index: 1, kind: input, shape index: {}]
  %s2 = inlined_call_operand.vmem [shape: f32[32,1], index: 2, kind: input, shape index: {}]
  %s3 = inlined_call_operand.hbm [shape: f32[32,128], index: 3, kind: output, shape index: {}]
  %s4 = sld [smem:[#allocation0]]
  $region22: #{tpu_custom_call.1} parent=0
    _
  %s6 = ssub.s32 1, %s4
  %s7 = scalar_select 0, %s6, %s4
  $region1: #{tpu_custom_call.1} parent=0
    #allocation2 [shape = 'u8[16384]{0}', space=vmem, size = 0x4000, scoped, tag = 'output window, operand 0, single buffered']
    #allocation3 [shape = 's32[1]{0}', space=sflag, size = 0x4, scoped, tag = 'scoped memory for tpu_custom_call.1']
    %8 = vsyncpa [#allocation3], 0
    // Predicated region
    $region2: #{tpu_custom_call.1} parent=1 // pred_check
      _
    $region3: #{tpu_custom_call.1} parent=1 // pred_check_branch
      %10 = sbr.rel (0) target = $region5
    $region4: #{tpu_custom_call.1} parent=1 // pred_region
      _
    $region5: #{tpu_custom_call.1} parent=1 // pred_fallthru
      _
    // Predicated region
    $region6: #{tpu_custom_call.1} parent=1 // pred_check
      _
    $region7: #{tpu_custom_call.1} parent=1 // pred_check_branch
      %12 = sbr.rel (0) target = $region9
    $region8: #{tpu_custom_call.1} parent=1 // pred_region
      _
    $region9: #{tpu_custom_call.1} parent=1 // pred_fallthru
      _
    // Predicated region
    $region10: #{tpu_custom_call.1} parent=1 // pred_check
      _
    $region11: #{tpu_custom_call.1} parent=1 // pred_check_branch
      %14 = sbr.rel (0) target = $region13
    $region12: #{tpu_custom_call.1} parent=1 // pred_region
      _
    $region13: #{tpu_custom_call.1} parent=1 // pred_fallthru
      _
    %v15 = vld [vmem:[%s1] sm:$0xff]
    %v16 = vld [vmem:[%s1 + $0x8] sm:$0xff]
    %v17 = vld [vmem:[%s1 + $0x10] sm:$0xff]
    %v18 = vld [vmem:[%s1 + $0x18] sm:$0xff]
    %v19 = vld [vmem:[%s0] sm:$0xf]
    %v20 = vld [vmem:[%s2] sm:$0xff]
    %v21 = vld [vmem:[%s2 + $0x8] sm:$0xff]
    %v22 = vld [vmem:[%s2 + $0x10] sm:$0xff]
    %v23 = vld [vmem:[%s2 + $0x18] sm:$0xff]
    %25 = vset.pattern.permute.xlu0 0
    %26 = vperm.xlu0 %25, %v20
    %v27 = vpop.permute.xlu0 %26
    %30 = vset.pattern.permute.xlu0 0
    %31 = vperm.xlu0 %30, %v21
    %v32 = vpop.permute.xlu0 %31
    %35 = vset.pattern.permute.xlu0 0
    %36 = vperm.xlu0 %35, %v22
    %v37 = vpop.permute.xlu0 %36
    %40 = vset.pattern.permute.xlu0 0
    %41 = vperm.xlu0 %40, %v23
    %v42 = vpop.permute.xlu0 %41
    %vm44 = vcmask 31744
    %v46 = vsel %vm44, %v15, 0
    %v49 = vsel %vm44, %v16, 0
    %v52 = vsel %vm44, %v17, 0
    %v55 = vsel %vm44, %v18, 0
    %vm57 = vcmask 1043456
    %v59 = vsel %vm57, %v19, 0
    %61 = vmatpush.msra.mxu0 0.0
    %62 = vmatpush.msra.mxu0 0.0
    %63 = vmatpush.msra.mxu0 0.0
    %64 = vmatpush.msra.mxu0 0.0
    %65 = vmatpush.msra.mxu0 0.0
    %66 = vmatpush.msra.mxu0 0.0
    %67 = vmatpush.msra.mxu0 0.0
    %68 = vmatpush.msra.mxu0 0.0
    %69 = vmatpush.msra.mxu0 0.0
    %70 = vmatpush.msra.mxu0 0.0
    %71 = vmatpush.msra.mxu0 0.0
    %72 = vmatpush.msra.mxu0 0.0
    %73 = vmatpush.msra.mxu0 0.0
    %74 = vmatpush.msra.mxu0 0.0
    %75 = vmatpush.msra.mxu0 0.0
    %76 = vmatpush.msra.mxu0 %v59
    %77 = vmatmul.f32.gmra.mxu0 %v46
    %v78 = vpop.f32.mrf.mxu0
    %v79 = vadd.f32 %v27, %v78
    %80 = vmatmul.f32.gmra.mxu0 %v49
    %v81 = vpop.f32.mrf.mxu0
    %v82 = vadd.f32 %v32, %v81
    %83 = vmatmul.f32.gmra.mxu0 %v52
    %v84 = vpop.f32.mrf.mxu0
    %v85 = vadd.f32 %v37, %v84
    %86 = vmatmul.f32.gmra.mxu0 %v55
    %v87 = vpop.f32.mrf.mxu0
    %v88 = vadd.f32 %v42, %v87
    %89 = vdwg.mxu0
    %90 = vst [vmem:[#allocation2] sm:$0xff] %v79
    %91 = vst [vmem:[#allocation2 + $0x8] sm:$0xff] %v82
    %92 = vst [vmem:[#allocation2 + $0x10] sm:$0xff] %v85
    %93 = vst [vmem:[#allocation2 + $0x18] sm:$0xff] %v88
    // Predicated region
    $region14: #{tpu_custom_call.1} parent=1 // pred_check
      _
    $region15: #{tpu_custom_call.1} parent=1 // pred_check_branch
      %95 = sbr.rel (0) target = $region17
    $region16: #{tpu_custom_call.1} parent=1 // pred_region
      %97 = vsyncadd [#allocation3], 0
      %s98 = sshll.u32 [#allocation2], 4
      %s99 = int_to_ptr.vmem [resolvable:$true] %s98
      %s100 = sshll.u32 %s3, 4
      %s101 = int_to_ptr.hbm [resolvable:$true] %s100
      %106 = dma.vmem_to_hbm [thread:$0]  %s99, 512, %s101, [#allocation3], 128, 128, 8
    $region17: #{tpu_custom_call.1} parent=1 // pred_fallthru
      _
    // Predicated region
    $region18: #{tpu_custom_call.1} parent=1 // pred_check
      _
    $region19: #{tpu_custom_call.1} parent=1 // pred_check_branch
      %108 = sbr.rel (0) target = $region21
    $region20: #{tpu_custom_call.1} parent=1 // pred_region
      %110 = dma.done [#allocation3], 512
    $region21: #{tpu_custom_call.1} parent=1 // pred_fallthru
      _
    %111 = vsyncpa [#allocation3], 1

</llo_original>
